<compile_context>
chip_gen: v6e
topology: v6e:2x2x1
jax: 0.10.0
libtpu: 0.0.40
codegen_flags: <defaults>
</compile_context>

<pallas_src>
import math

import jax
import jax.numpy as jnp
from jax.experimental import pallas as pl
from jax.experimental.pallas import tpu as pltpu


def _round_up(n, m):
    return ((n + m - 1) // m) * m


def _pick_time_block(T):
    """Largest divisor of T among {32,16,8,4,2,1} — timesteps processed per grid step."""
    for cand in (32, 16, 8, 4, 2, 1):
        if T % cand == 0:
            return cand
    return 1


def _pick_batch_tile(B, Hp):
    """Batch tile: a multiple-of-8 divisor of B (else the whole batch).

    Smaller tiles when Hp is large (bounds vreg pressure in the sigmoid/blend
    epilogue); force >= 2 tiles for large H so the 'parallel' batch axis actually
    spans both v7x TensorCores.
    """
    if B <= 8 or B % 8 != 0:
        return B
    target = 64 if Hp >= 256 else 128
    if Hp >= 512 and B >= 16:
        target = min(target, max(8, B // 2))
    best = 8
    for d in range(8, min(B, target) + 1, 8):
        if B % d == 0:
            best = d
    return best


def _cell_scan_kernel(x_ref, r0_ref, wt_ref, pt_ref, b_ref, out_ref,
                      r_carry, xproj_ref):
    """One (batch_tile, time_block) grid point: Tt fused-gate GRU steps."""
    b_idx = pl.program_id(0)          # batch-tile index ("parallel" axis)
    t_blk = pl.program_id(1)          # time-block index ("arbitrary" axis, sequential)
    tt, b_tile, in_dim = x_ref.shape
    h_pad = r_carry.shape[1]
    w_dtype = wt_ref.dtype

    # ---- initialize the recurrent carry at the start of each batch tile's sequence ---
    # NOTE: the carry scratch is shared across the "parallel" batch axis.  Mosaic runs
    # the grid row-major per core, so each batch tile executes its full time loop
    # contiguously and sees its own freshly initialized carry; do not reorder the grid.
    @pl.when(t_blk == 0)
    def _init():
        if r0_ref.shape[0] == 1:
            # (1, Hp) initial state: broadcast in-register (never materialized per batch).
            r_carry[...] = jnp.broadcast_to(r0_ref[...], (b_tile, h_pad))
        else:
            start = pl.multiple_of(b_idx * b_tile, b_tile)
            r_carry[...] = r0_ref[pl.ds(start, b_tile), :]

    # ---- hoisted input projection + bias for the whole time block (off the serial
    # recurrence): xproj[t] = x[t] @ Pt + [b_z | b_v]  --------------------------------
    bias = jnp.broadcast_to(b_ref[...], (b_tile, 2 * h_pad))   # single broadcast, reused
    if b_tile % 8 == 0 and tt > 1:
        # Sublane-aligned batch tile: one fused (Tt*b_tile, I) x (I, 2*Hp) matmul.
        x2d = x_ref[...].reshape(tt * b_tile, in_dim)
        proj = jnp.dot(x2d.astype(w_dtype), pt_ref[...],
                       preferred_element_type=jnp.float32)
        xproj_ref[...] = proj.reshape(tt, b_tile, 2 * h_pad) + bias
    else:
        # Tiny / unaligned batch tile: per-step 2-D matmuls (static trace-time unroll),
        # still entirely off the recurrent critical path.
        for t in range(tt):
            xproj_ref[t] = jnp.dot(x_ref[t].astype(w_dtype), pt_ref[...],
                                   preferred_element_type=jnp.float32) + bias

    # ---- serial recurrence over the Tt in-VMEM timesteps ----------------------------
    def step(t, r):
        gates = jnp.dot(r.astype(w_dtype), wt_ref[...],
                        preferred_element_type=jnp.float32) + xproj_ref[t]
        z = jax.nn.sigmoid(gates[:, :h_pad])        # update gate   (EUP)
        h = jax.nn.sigmoid(gates[:, h_pad:])        # candidate     (EUP)
        r_new = r + z * (h - r)                     # 3 VALU ops / element
        out_ref[t] = r_new.astype(out_ref.dtype)
        return r_new

    r_carry[...] = jax.lax.fori_loop(0, tt, step, r_carry[...], unroll=True)


def multiscale_rnn_cell_scan(xs, r0, W, P, b_v, W_z, P_z, b_z, *,
                             param_dtype=jnp.bfloat16, out_dtype=jnp.float32):
    """Run T steps of multiscale_RNN_cell in a single pallas_call.

    xs: (T, B, I); r0: (1, H) or (B, H).  Returns all hidden states, shape (T, B, H);
    the final state is out[-1].

    param_dtype=bf16 (default) halves resident weight VMEM and runs the MXU at its
    native bf16 rate with f32 accumulation; recurrent bf16 error can compound over long
    sequences (use ~2e-2 tolerances, or pass param_dtype=jnp.float32).
    out_dtype=bf16 halves the per-step HBM write (useful on v5e's single vst slot).
    """
    T, B, I = xs.shape
    H = W.shape[0]

    Hp = _round_up(H, 128)            # lane dim of the state / MXU N (lane-dense stores)
    Tt = _pick_time_block(T)
    n_t = T // Tt
    b_tile = _pick_batch_tile(B, Hp)
    n_b = B // b_tile

    # --- static "multiscale" mask folded into the weights ONCE (not per step) ---------
    row_mask = (jnp.arange(H)[:, None] < (H // 2)).astype(P.dtype)
    P_masked = P * row_mask

    # --- fused, pre-transposed (K, N) weights: [z-gate | candidate] along N -----------
    # Padded rows/columns [H:Hp] stay exactly zero: the padded lanes of r then never
    # contaminate the real gate columns, and the wrapper slices them off the output.
    Wt = jnp.zeros((Hp, 2 * Hp), param_dtype)                 # recurrent weights, K = Hp
    Wt = Wt.at[:H, :H].set(W_z.T.astype(param_dtype))
    Wt = Wt.at[:H, Hp:Hp + H].set(W.T.astype(param_dtype))

    Pt = jnp.zeros((I, 2 * Hp), param_dtype)                  # input projections, K = I
    Pt = Pt.at[:, :H].set(P_z.T.astype(param_dtype))
    Pt = Pt.at[:, Hp:Hp + H].set(P_masked.T.astype(param_dtype))

    bc = jnp.zeros((1, 2 * Hp), jnp.float32)                  # bias row (f32 epilogue)
    bc = bc.at[0, :H].set(b_z.reshape(H).astype(jnp.float32))
    bc = bc.at[0, Hp:Hp + H].set(b_v.reshape(H).astype(jnp.float32))

    # --- activations: xs is passed UNPADDED (no wrapper pad copy) ----------------------
    xs_f = xs.astype(jnp.float32)
    if r0.shape[0] == 1:
        r0_p = jnp.zeros((1, Hp), jnp.float32).at[:, :H].set(r0.astype(jnp.float32))
    else:
        r0_p = jnp.zeros((B, Hp), jnp.float32).at[:, :H].set(r0.astype(jnp.float32))

    # --- VMEM budget: ~80% of physical VMEM (≈51 MiB on v7x, ≈102 MiB on v5e/v6e) -----
    try:
        vmem_cap = getattr(pltpu.get_tpu_info(), "vmem_capacity_bytes", 64 << 20)
    except Exception:  # pragma: no cover - conservative fallback off-TPU
        vmem_cap = 64 << 20
    w_item = jnp.dtype(param_dtype).itemsize
    o_item = jnp.dtype(out_dtype).itemsize
    resident = (Wt.size + Pt.size) * w_item + (bc.size + r0_p.size) * 4
    x_blk = Tt * b_tile * I * 4
    out_blk = Tt * b_tile * Hp * o_item
    xproj_bytes = Tt * b_tile * 2 * Hp * 4
    carry_bytes = b_tile * Hp * 4
    need = resident + 2 * (x_blk + out_blk) + xproj_bytes + carry_bytes
    vmem_limit = min(max(2 * need + (8 << 20), 32 << 20), int(0.8 * vmem_cap))
    # TODO(synk): when resident Wt+Pt approach ~0.6*vmem_cap (large H on v7x), add a
    # gate-column (N) grid axis that tiles Wt/Pt in 2*128-column chunks instead of
    # keeping them whole-array VMEM residents.

    # Whole-array, single-buffered VMEM residents (DMA'd from HBM once, reused for all T).
    resident_spec = pl.BlockSpec(memory_space=pltpu.MemorySpace.VMEM)

    out = pl.pallas_call(
        _cell_scan_kernel,
        out_shape=jax.ShapeDtypeStruct((T, B, Hp), out_dtype),
        grid=(n_b, n_t),
        in_specs=[
            pl.BlockSpec((Tt, b_tile, I), lambda b, t: (t, b, 0)),   # time-blocked x
            resident_spec,                                           # r0
            resident_spec,                                           # Wt = [W_z^T | W^T]
            resident_spec,                                           # Pt = [P_z^T | P_m^T]
            resident_spec,                                           # bias row
        ],
        out_specs=pl.BlockSpec((Tt, b_tile, Hp), lambda b, t: (t, b, 0)),
        scratch_shapes=[
            pltpu.VMEM((b_tile, Hp), jnp.float32),            # r carry across time blocks
            pltpu.VMEM((Tt, b_tile, 2 * Hp), jnp.float32),    # hoisted xproj for the block
        ],
        compiler_params=pltpu.CompilerParams(
            dimension_semantics=("parallel", "arbitrary"),
            vmem_limit_bytes=vmem_limit,
        ),
    )(xs_f, r0_p, Wt, Pt, bc)

    return out[:, :, :H]


def multiscale_rnn_cell_step(x, r, W, P, b_v, W_z, P_z, b_z, *,
                             param_dtype=jnp.bfloat16, out_dtype=jnp.float32):
    """One forward step (the PyTorch module's forward). x: (B, I), r: (1, H) or (B, H)."""
    out = multiscale_rnn_cell_scan(x[None], r, W, P, b_v, W_z, P_z, b_z,
                                   param_dtype=param_dtype, out_dtype=out_dtype)
    return out[0]


if __name__ == "__main__":
    B, I, H, T = 2, 4, 32, 8

    key = jax.random.PRNGKey(0)
    ks = jax.random.split(key, 7)
    bound = 1.0 / math.sqrt(H)                    # nn.init.uniform_(-1/sqrt(H), 1/sqrt(H))
    init = lambda k, shape: jax.random.uniform(
        k, shape, jnp.float32, minval=-bound, maxval=bound)

    W   = init(ks[0], (H, H))
    P   = init(ks[1], (H, I))
    b_v = init(ks[2], (H, 1))
    W_z = init(ks[3], (H, H))
    P_z = init(ks[4], (H, I))
    b_z = init(ks[5], (H, 1))

    xs = jax.random.uniform(ks[6], (T, B, I), dtype=jnp.float32)
    r0 = jnp.zeros((1, H), dtype=jnp.float32)     # self.r_t initial state

    # pure-JAX reference reproducing the PyTorch (H, B) column-major forward
    def ref_step(x, r):
        rT = jnp.broadcast_to(r, (x.shape[0], H)).T          # (H, B)
        xT = x.T                                              # (I, B)
        z = jax.nn.sigmoid(W_z @ rT + P_z @ xT + b_z)
        Pm = P * (jnp.arange(H)[:, None] < (H // 2)).astype(P.dtype)
        h = jax.nn.sigmoid(W @ rT + Pm @ xT + b_v)
        return ((1.0 - z) * rT + z * h).T                     # (B, H)

    def ref_scan(xs, r):
        outs = []
        for t in range(xs.shape[0]):
            r = ref_step(xs[t], r)
            outs.append(r)
        return jnp.stack(outs)

    rs_ref = ref_scan(xs, r0)

    # 1) single forward step, f32 weights, tight tolerance
    r1 = jax.block_until_ready(
        multiscale_rnn_cell_step(xs[0], r0, W, P, b_v, W_z, P_z, b_z,
                                 param_dtype=jnp.float32))
    r1_ref = ref_step(xs[0], r0)
    assert r1.shape == (B, H)
    assert jnp.allclose(r1, r1_ref, atol=1e-4), float(jnp.max(jnp.abs(r1 - r1_ref)))

    # 2) whole sequence (time-blocked, one pallas_call), f32 weights
    rs = jax.block_until_ready(
        multiscale_rnn_cell_scan(xs, r0, W, P, b_v, W_z, P_z, b_z,
                                 param_dtype=jnp.float32))
    assert rs.shape == (T, B, H)
    assert jnp.allclose(rs, rs_ref, atol=1e-4), float(jnp.max(jnp.abs(rs - rs_ref)))

    # 3) default bf16 weights (v6e/v7x default), f32 accumulation + f32 epilogue.
    #    bf16 recurrent error compounds over T, hence the looser tolerance.
    rs_bf16 = jax.block_until_ready(
        multiscale_rnn_cell_scan(xs, r0, W, P, b_v, W_z, P_z, b_z))
    assert rs_bf16.shape == (T, B, H)
    assert jnp.allclose(rs_bf16, rs_ref, atol=2e-2), float(jnp.max(jnp.abs(rs_bf16 - rs_ref)))

    print("KERNEL_OK")
</pallas_src>

<mosaic_0001>
module attributes {stable_mosaic.version = 11 : i64} {
  func.func @_cell_scan_kernel(%arg0: i32, %arg1: i32, %arg2: memref<1x2x4xf32, #tpu.memory_space<vmem>>, %arg3: memref<1x128xf32, #tpu.memory_space<vmem>>, %arg4: memref<128x256xf32, #tpu.memory_space<vmem>>, %arg5: memref<4x256xf32, #tpu.memory_space<vmem>>, %arg6: memref<1x256xf32, #tpu.memory_space<vmem>>, %arg7: memref<1x2x128xf32, #tpu.memory_space<vmem>>, %arg8: memref<2x128xf32, #tpu.memory_space<vmem>>, %arg9: memref<1x2x256xf32, #tpu.memory_space<vmem>>) attributes {dimension_semantics = [#tpu.dimension_semantics<parallel>, #tpu.dimension_semantics<arbitrary>], iteration_bounds = array<i64: 1, 1>, scalar_prefetch = 0 : i64, scratch_operands = 2 : i64, tpu.core_type = #tpu.core_type<tc>, window_params = [{transform_indices = @transform_0, window_bounds = array<i64: 1, 2, 4>}, {pipeline_mode = #tpu.pipeline_mode<synchronous>, transform_indices = @transform_1, window_bounds = array<i64: 1, 128>}, {pipeline_mode = #tpu.pipeline_mode<synchronous>, transform_indices = @transform_2, window_bounds = array<i64: 128, 256>}, {pipeline_mode = #tpu.pipeline_mode<synchronous>, transform_indices = @transform_3, window_bounds = array<i64: 4, 256>}, {pipeline_mode = #tpu.pipeline_mode<synchronous>, transform_indices = @transform_4, window_bounds = array<i64: 1, 256>}, {transform_indices = @transform_5, window_bounds = array<i64: 1, 2, 128>}]} {
    %c0_i32 = arith.constant 0 : i32
    %0 = arith.cmpi eq, %arg1, %c0_i32 : i32
    %1 = arith.extui %0 : i1 to i32
    %c0_i32_0 = arith.constant 0 : i32
    %2 = arith.cmpi ne, %1, %c0_i32_0 : i32
    scf.if %2 {
      %c0_24 = arith.constant 0 : index
      %c0_25 = arith.constant 0 : index
      %41 = vector.load %arg3[%c0_24, %c0_25] : memref<1x128xf32, #tpu.memory_space<vmem>>, vector<1x128xf32>
      %42 = vector.shape_cast %41 : vector<1x128xf32> to vector<1x128xf32>
      %43 = vector.broadcast %42 : vector<1x128xf32> to vector<2x128xf32>
      %c0_26 = arith.constant 0 : index
      %c0_27 = arith.constant 0 : index
      %44 = vector.load %arg8[%c0_26, %c0_27] : memref<2x128xf32, #tpu.memory_space<vmem>>, vector<2x128xf32>
      tpu.vector_store %arg8[%c0_26, %c0_27], %43 {strides = array<i32>} : memref<2x128xf32, #tpu.memory_space<vmem>>, vector<2x128xf32>,
    } else {
    }
    %c0 = arith.constant 0 : index
    %c0_1 = arith.constant 0 : index
    %3 = vector.load %arg6[%c0, %c0_1] : memref<1x256xf32, #tpu.memory_space<vmem>>, vector<1x256xf32>
    %4 = vector.shape_cast %3 : vector<1x256xf32> to vector<1x256xf32>
    %5 = vector.broadcast %4 : vector<1x256xf32> to vector<2x256xf32>
    %c0_2 = arith.constant 0 : index
    %c0_3 = arith.constant 0 : index
    %c0_4 = arith.constant 0 : index
    %6 = vector.load %arg2[%c0_2, %c0_3, %c0_4] : memref<1x2x4xf32, #tpu.memory_space<vmem>>, vector<1x2x4xf32>
    %7 = vector.shape_cast %6 : vector<1x2x4xf32> to vector<2x4xf32>
    %c0_5 = arith.constant 0 : index
    %c0_6 = arith.constant 0 : index
    %8 = vector.load %arg5[%c0_5, %c0_6] : memref<4x256xf32, #tpu.memory_space<vmem>>, vector<4x256xf32>
    %cst = arith.constant dense<0.000000e+00> : vector<2x256xf32>
    %9 = tpu.matmul %7, %8, %cst {dimension_numbers = #tpu.dot_dimension_numbers<[1], [0], [0], [1], [0, 0, 1, 1], [], []>} : vector<2x4xf32>, vector<4x256xf32>, vector<2x256xf32> -> vector<2x256xf32>
    %10 = arith.addf %9, %5 : vector<2x256xf32>
    %c0_7 = arith.constant 0 : index
    %c0_8 = arith.constant 0 : index
    %c0_9 = arith.constant 0 : index
    %11 = vector.load %arg9[%c0_7, %c0_8, %c0_9] : memref<1x2x256xf32, #tpu.memory_space<vmem>>, vector<1x2x256xf32>
    %12 = vector.shape_cast %11 : vector<1x2x256xf32> to vector<2x256xf32>
    %13 = vector.shape_cast %10 : vector<2x256xf32> to vector<1x2x256xf32>
    tpu.vector_store %arg9[%c0_7, %c0_8, %c0_9], %13 {strides = array<i32>} : memref<1x2x256xf32, #tpu.memory_space<vmem>>, vector<1x2x256xf32>,
    %c0_10 = arith.constant 0 : index
    %c0_11 = arith.constant 0 : index
    %14 = vector.load %arg8[%c0_10, %c0_11] : memref<2x128xf32, #tpu.memory_space<vmem>>, vector<2x128xf32>
    %c0_i32_12 = arith.constant 0 : i32
    %c0_13 = arith.constant 0 : index
    %c0_14 = arith.constant 0 : index
    %15 = vector.load %arg4[%c0_13, %c0_14] : memref<128x256xf32, #tpu.memory_space<vmem>>, vector<128x256xf32>
    %cst_15 = arith.constant dense<0.000000e+00> : vector<2x256xf32>
    %16 = tpu.matmul %14, %15, %cst_15 {dimension_numbers = #tpu.dot_dimension_numbers<[1], [0], [0], [1], [0, 0, 1, 1], [], []>} : vector<2x128xf32>, vector<128x256xf32>, vector<2x256xf32> -> vector<2x256xf32>
    %17 = arith.index_cast %c0_i32_12 : i32 to index
    %c0_16 = arith.constant 0 : index
    %c0_17 = arith.constant 0 : index
    %18 = vector.load %arg9[%17, %c0_16, %c0_17] : memref<1x2x256xf32, #tpu.memory_space<vmem>>, vector<1x2x256xf32>
    %19 = vector.shape_cast %18 : vector<1x2x256xf32> to vector<2x256xf32>
    %20 = arith.addf %16, %19 : vector<2x256xf32>
    %21 = vector.extract_strided_slice %20 {offsets = [0, 0], sizes = [2, 128], strides = [1, 1]} : vector<2x256xf32> to vector<2x128xf32>
    %22 = arith.negf %21 : vector<2x128xf32>
    %23 = math.exp %22 : vector<2x128xf32>
    %cst_18 = arith.constant 1.000000e+00 : f32
    %24 = vector.broadcast %cst_18 : f32 to vector<2x128xf32>
    %25 = arith.addf %24, %23 : vector<2x128xf32>
    %26 = arith.divf %24, %25 : vector<2x128xf32>
    %27 = vector.extract_strided_slice %20 {offsets = [0, 128], sizes = [2, 128], strides = [1, 1]} : vector<2x256xf32> to vector<2x128xf32>
    %28 = arith.negf %27 : vector<2x128xf32>
    %29 = math.exp %28 : vector<2x128xf32>
    %cst_19 = arith.constant 1.000000e+00 : f32
    %30 = vector.broadcast %cst_19 : f32 to vector<2x128xf32>
    %31 = arith.addf %30, %29 : vector<2x128xf32>
    %32 = arith.divf %30, %31 : vector<2x128xf32>
    %33 = arith.subf %32, %14 : vector<2x128xf32>
    %34 = arith.mulf %26, %33 : vector<2x128xf32>
    %35 = arith.addf %14, %34 : vector<2x128xf32>
    %36 = arith.index_cast %c0_i32_12 : i32 to index
    %c0_20 = arith.constant 0 : index
    %c0_21 = arith.constant 0 : index
    %37 = vector.load %arg7[%36, %c0_20, %c0_21] : memref<1x2x128xf32, #tpu.memory_space<vmem>>, vector<1x2x128xf32>
    %38 = vector.shape_cast %37 : vector<1x2x128xf32> to vector<2x128xf32>
    %39 = vector.shape_cast %35 : vector<2x128xf32> to vector<1x2x128xf32>
    tpu.vector_store %arg7[%36, %c0_20, %c0_21], %39 {strides = array<i32>} : memref<1x2x128xf32, #tpu.memory_space<vmem>>, vector<1x2x128xf32>,
    %c1_i32 = arith.constant 1 : i32
    %c0_22 = arith.constant 0 : index
    %c0_23 = arith.constant 0 : index
    %40 = vector.load %arg8[%c0_22, %c0_23] : memref<2x128xf32, #tpu.memory_space<vmem>>, vector<2x128xf32>
    tpu.vector_store %arg8[%c0_22, %c0_23], %35 {strides = array<i32>} : memref<2x128xf32, #tpu.memory_space<vmem>>, vector<2x128xf32>,
    return
  }
  func.func @transform_0(%arg0: i32, %arg1: i32) -> (i32, i32, i32) {
    %c0_i32 = arith.constant 0 : i32
    %c0_i32_0 = arith.constant 0 : i32
    return %arg1, %arg0, %c0_i32 : i32, i32, i32
  }
  func.func @transform_1(%arg0: i32, %arg1: i32) -> (i32, i32) {
    %c0_i32 = arith.constant 0 : i32
    %c0_i32_0 = arith.constant 0 : i32
    %c0_i32_1 = arith.constant 0 : i32
    return %c0_i32, %c0_i32_0 : i32, i32
  }
  func.func @transform_2(%arg0: i32, %arg1: i32) -> (i32, i32) {
    %c0_i32 = arith.constant 0 : i32
    %c0_i32_0 = arith.constant 0 : i32
    %c0_i32_1 = arith.constant 0 : i32
    return %c0_i32, %c0_i32_0 : i32, i32
  }
  func.func @transform_3(%arg0: i32, %arg1: i32) -> (i32, i32) {
    %c0_i32 = arith.constant 0 : i32
    %c0_i32_0 = arith.constant 0 : i32
    %c0_i32_1 = arith.constant 0 : i32
    return %c0_i32, %c0_i32_0 : i32, i32
  }
  func.func @transform_4(%arg0: i32, %arg1: i32) -> (i32, i32) {
    %c0_i32 = arith.constant 0 : i32
    %c0_i32_0 = arith.constant 0 : i32
    %c0_i32_1 = arith.constant 0 : i32
    return %c0_i32, %c0_i32_0 : i32, i32
  }
  func.func @transform_5(%arg0: i32, %arg1: i32) -> (i32, i32, i32) {
    %c0_i32 = arith.constant 0 : i32
    %c0_i32_0 = arith.constant 0 : i32
    return %arg1, %arg0, %c0_i32 : i32, i32, i32
  }
}

</mosaic_0001>

<llo_original>
// kernel: tpu_custom_call.1
$region0: #{tpu_custom_call.1}
  #allocation0 [shape = 'u32[]', space=smem, size = 0x4, offset = 0x4, fixed_abs, tag = 'smem constant byte address 0x4 - core index']
  #allocation1 [shape = 'u32[144,128]{1,0:T(1,128)}', space=vmem, size = 0x12000, scoped, tag = 'internal scratch']
  #allocation2 [shape = 'f32[2,128]{1,0:T(2,128)}', space=vmem, size = 0x400, scoped, tag = 'scratch operand']
  #allocation3 [shape = 'f32[1,2,256]{2,1,0:T(2,128)}', space=vmem, size = 0x800, scoped, tag = 'scratch operand']
  %s0 = inlined_call_operand.hbm [shape: f32[1,2,4], index: 0, kind: input, shape index: {}]
  %s1 = inlined_call_operand.vmem [shape: f32[1,128], index: 1, kind: input, shape index: {}]
  %s2 = inlined_call_operand.hbm [shape: f32[128,256], index: 2, kind: input, shape index: {}]
  %s3 = inlined_call_operand.hbm [shape: f32[4,256], index: 3, kind: input, shape index: {}]
  %s4 = inlined_call_operand.vmem [shape: f32[1,256], index: 4, kind: input, shape index: {}]
  %s5 = inlined_call_operand.hbm [shape: f32[1,2,128], index: 5, kind: output, shape index: {}]
  %s6 = sld [smem:[#allocation0]]
  $region46: #{tpu_custom_call.1} parent=0
    _
  %s8 = ssub.s32 1, %s6
  %s9 = scalar_select 0, %s8, %s6
  $region1: #{tpu_custom_call.1} parent=0
    #allocation4 [shape = 'u8[1024]{0}', space=vmem, size = 0x400, scoped, tag = 'input window, operand 0, single buffered']
    #allocation5 [shape = 's32[1]{0}', space=sflag, size = 0x4, scoped, tag = 'scoped memory for tpu_custom_call.1']
    #allocation6 [shape = 's32[1]{0}', space=sflag, size = 0x4, scoped, tag = 'scoped memory for tpu_custom_call.1']
    #allocation7 [shape = 'u8[131072]{0}', space=vmem, size = 0x20000, scoped, tag = 'input window, operand 2, single buffered']
    #allocation8 [shape = 's32[1]{0}', space=sflag, size = 0x4, scoped, tag = 'scoped memory for tpu_custom_call.1']
    #allocation9 [shape = 'u8[4096]{0}', space=vmem, size = 0x1000, scoped, tag = 'input window, operand 3, single buffered']
    #allocation10 [shape = 'u8[1024]{0}', space=vmem, size = 0x400, scoped, tag = 'output window, operand 0, single buffered']
    %10 = vsyncpa [#allocation5], 0
    %11 = vsyncpa [#allocation8], 0
    %12 = vsyncpa [#allocation6], 0
    // Predicated region
    $region2: #{tpu_custom_call.1} parent=1 // pred_check
      _
    $region3: #{tpu_custom_call.1} parent=1 // pred_check_branch
      %14 = sbr.rel (0) target = $region5
    $region4: #{tpu_custom_call.1} parent=1 // pred_region
      %s16 = ssub.s32 32, 32
      %17 = vsyncadd [#allocation5], %s16
      %s19 = sshll.u32 [#allocation4], 4
      %s20 = int_to_ptr.vmem [resolvable:$true] %s19
      %22 = dma.hbm_to_vmem [thread:$0]  %s0, 32, %s20, [#allocation5]
    $region5: #{tpu_custom_call.1} parent=1 // pred_fallthru
      _
    // Predicated region
    $region6: #{tpu_custom_call.1} parent=1 // pred_check
      _
    $region7: #{tpu_custom_call.1} parent=1 // pred_check_branch
      %24 = sbr.rel (0) target = $region9
    $region8: #{tpu_custom_call.1} parent=1 // pred_region
      _
    $region9: #{tpu_custom_call.1} parent=1 // pred_fallthru
      _
    // Predicated region
    $region10: #{tpu_custom_call.1} parent=1 // pred_check
      _
    $region11: #{tpu_custom_call.1} parent=1 // pred_check_branch
      %26 = sbr.rel (0) target = $region13
    $region12: #{tpu_custom_call.1} parent=1 // pred_region
      %s28 = ssub.s32 4096, 4096
      %29 = vsyncadd [#allocation8], %s28
      %s30 = sshll.u32 [#allocation7], 4
      %s31 = int_to_ptr.vmem [resolvable:$true] %s30
      %36 = dma.hbm_to_vmem [thread:$0]  %s2, 4096, %s31, [#allocation8], 256, 256, 16
    $region13: #{tpu_custom_call.1} parent=1 // pred_fallthru
      _
    // Predicated region
    $region14: #{tpu_custom_call.1} parent=1 // pred_check
      _
    $region15: #{tpu_custom_call.1} parent=1 // pred_check_branch
      %38 = sbr.rel (0) target = $region17
    $region16: #{tpu_custom_call.1} parent=1 // pred_region
      %s40 = ssub.s32 128, 128
      %41 = vsyncadd [#allocation8], %s40
      %s43 = sshll.u32 [#allocation9], 4
      %s44 = int_to_ptr.vmem [resolvable:$true] %s43
      %46 = dma.hbm_to_vmem [thread:$0]  %s3, 128, %s44, [#allocation8]
    $region17: #{tpu_custom_call.1} parent=1 // pred_fallthru
      _
    // Predicated region
    $region18: #{tpu_custom_call.1} parent=1 // pred_check
      _
    $region19: #{tpu_custom_call.1} parent=1 // pred_check_branch
      %48 = sbr.rel (0) target = $region21
    $region20: #{tpu_custom_call.1} parent=1 // pred_region
      _
    $region21: #{tpu_custom_call.1} parent=1 // pred_fallthru
      _
    // Predicated region
    $region22: #{tpu_custom_call.1} parent=1 // pred_check
      _
    $region23: #{tpu_custom_call.1} parent=1 // pred_check_branch
      %50 = sbr.rel (0) target = $region25
    $region24: #{tpu_custom_call.1} parent=1 // pred_region
      %51 = dma.done [#allocation5], 32
    $region25: #{tpu_custom_call.1} parent=1 // pred_fallthru
      _
    // Predicated region
    $region26: #{tpu_custom_call.1} parent=1 // pred_check
      _
    $region27: #{tpu_custom_call.1} parent=1 // pred_check_branch
      %53 = sbr.rel (0) target = $region29
    $region28: #{tpu_custom_call.1} parent=1 // pred_region
      %54 = dma.done [#allocation8], 4096
    $region29: #{tpu_custom_call.1} parent=1 // pred_fallthru
      _
    // Predicated region
    $region30: #{tpu_custom_call.1} parent=1 // pred_check
      _
    $region31: #{tpu_custom_call.1} parent=1 // pred_check_branch
      %56 = sbr.rel (0) target = $region33
    $region32: #{tpu_custom_call.1} parent=1 // pred_region
      %57 = dma.done [#allocation8], 128
    $region33: #{tpu_custom_call.1} parent=1 // pred_fallthru
      _
    %p58 = scmp.eq.s32.totalorder 0, 0
    // Predicated region
    $region34: #{tpu_custom_call.1} parent=1 // pred_check
      %p59 = pneg %p58
    $region35: #{tpu_custom_call.1} parent=1 // pred_check_branch
      %61 = sbr.rel (%p59) target = $region37
    $region36: #{tpu_custom_call.1} parent=1 // pred_region
      %v62 = vld [vmem:[%s1] sm:$0x1]
      %v64 = vlaneseq
      %v65 = vshrl.u32 %v64, 7
      %v66 = vsub.s32 0, %v65
      %v67 = vrot.slane %v62, %v66
      %69 = vst [vmem:[#allocation2] sm:$0x3] %v67
    $region37: #{tpu_custom_call.1} parent=1 // pred_fallthru
      _
    %v70 = vld [vmem:[%s4] sm:$0x3]
    %v72 = vlaneseq
    %v73 = vshrl.u32 %v72, 7
    %v74 = vsub.s32 0, %v73
    %v75 = vrot.slane %v70, %v74
    %v76 = vlaneseq
    %v77 = vshrl.u32 %v76, 7
    %v78 = vsub.s32 1, %v77
    %v79 = vrot.slane %v70, %v78
    %v82 = vld [vmem:[#allocation4] sm:$0x3]
    %v83 = vld [vmem:[#allocation9] sm:$0xff]
    %v85 = vcombine.high %v83, %v83
    %vm86 = vcmask 31744
    %v88 = vsel %vm86, %v82, 0
    %vm90 = vcmask 1043456
    %v91 = vsel %vm90, %v83, 0
    %v93 = vsel %vm90, %v85, 0
    %95 = vmatprep.subr.mxu0 0.0
    %96 = vmatpush1.msra.mxu0 0.0
    %97 = vmatprep.subr.mxu0 0.0
    %98 = vmatpush1.msra.mxu0 0.0
    %99 = vmatprep.subr.mxu0 0.0
    %100 = vmatpush1.msra.mxu0 0.0
    %101 = vmatprep.subr.mxu0 0.0
    %102 = vmatpush1.msra.mxu0 0.0
    %103 = vmatprep.subr.mxu0 0.0
    %104 = vmatpush1.msra.mxu0 0.0
    %105 = vmatprep.subr.mxu0 0.0
    %106 = vmatpush1.msra.mxu0 0.0
    %107 = vmatprep.subr.mxu0 0.0
    %108 = vmatpush1.msra.mxu0 0.0
    %109 = vmatprep.subr.mxu0 0.0
    %110 = vmatpush1.msra.mxu0 0.0
    %111 = vmatprep.subr.mxu0 0.0
    %112 = vmatpush1.msra.mxu0 0.0
    %113 = vmatprep.subr.mxu0 0.0
    %114 = vmatpush1.msra.mxu0 0.0
    %115 = vmatprep.subr.mxu0 0.0
    %116 = vmatpush1.msra.mxu0 0.0
    %117 = vmatprep.subr.mxu0 0.0
    %118 = vmatpush1.msra.mxu0 0.0
    %119 = vmatprep.subr.mxu0 0.0
    %120 = vmatpush1.msra.mxu0 0.0
    %121 = vmatprep.subr.mxu0 0.0
    %122 = vmatpush1.msra.mxu0 0.0
    %123 = vmatprep.subr.mxu0 0.0
    %124 = vmatpush1.msra.mxu0 0.0
    %125 = vmatprep.subr.mxu0 %v93
    %126 = vmatpush1.msra.mxu0 %v91
    %127 = vmatprep.subr.mxu0 0.0
    %128 = vmatpush2.msra.mxu0 0.0
    %129 = vmatprep.subr.mxu0 0.0
    %130 = vmatpush2.msra.mxu0 0.0
    %131 = vmatprep.subr.mxu0 0.0
    %132 = vmatpush2.msra.mxu0 0.0
    %133 = vmatprep.subr.mxu0 0.0
    %134 = vmatpush2.msra.mxu0 0.0
    %135 = vmatprep.subr.mxu0 0.0
    %136 = vmatpush2.msra.mxu0 0.0
    %137 = vmatprep.subr.mxu0 0.0
    %138 = vmatpush2.msra.mxu0 0.0
    %139 = vmatprep.subr.mxu0 0.0
    %140 = vmatpush2.msra.mxu0 0.0
    %141 = vmatprep.subr.mxu0 0.0
    %142 = vmatpush2.msra.mxu0 0.0
    %143 = vmatprep.subr.mxu0 0.0
    %144 = vmatpush2.msra.mxu0 0.0
    %145 = vmatprep.subr.mxu0 0.0
    %146 = vmatpush2.msra.mxu0 0.0
    %147 = vmatprep.subr.mxu0 0.0
    %148 = vmatpush2.msra.mxu0 0.0
    %149 = vmatprep.subr.mxu0 0.0
    %150 = vmatpush2.msra.mxu0 0.0
    %151 = vmatprep.subr.mxu0 0.0
    %152 = vmatpush2.msra.mxu0 0.0
    %153 = vmatprep.subr.mxu0 0.0
    %154 = vmatpush2.msra.mxu0 0.0
    %155 = vmatprep.subr.mxu0 0.0
    %156 = vmatpush2.msra.mxu0 0.0
    %157 = vmatprep.subr.mxu0 0.0
    %158 = vmatpush2.msra.mxu0 0.0
    %159 = vmatprep.mubr.f32.mxu0 0.0
    %160 = vmatmul.mubr.f32.gmra.mxu0 %v88
    %v161 = vpop.f32.mrf.mxu0
    %v162 = vadd.f32 %v75, %v161
    %v163 = vpop.f32.mrf.mxu0
    %v164 = vadd.f32 %v79, %v163
    %165 = vdwg.mxu0
    %v168 = vcombine.low %v162, %v164
    %v170 = vunpack.c.l.s4 1983009808
    %v171 = vunpack.c.0.s8 %v170
    %v172 = vlaneseq
    %v173 = vshrl.u32 %v172, 7
    %v174 = vsub.s32 %v171, %v173
    %v175 = vrot.slane %v168, %v174
    %177 = vst [vmem:[#allocation3] sm:$0xf] %v175
    %v178 = vld [vmem:[#allocation2] sm:$0x3]
    %v179 = vld [vmem:[#allocation7] sm:$0xff]
    %v180 = vld [vmem:[#allocation7 + $0x8] sm:$0xff]
    %v181 = vld [vmem:[#allocation7 + $0x10] sm:$0xff]
    %v182 = vld [vmem:[#allocation7 + $0x18] sm:$0xff]
    %v183 = vld [vmem:[#allocation7 + $0x20] sm:$0xff]
    %v184 = vld [vmem:[#allocation7 + $0x28] sm:$0xff]
    %v185 = vld [vmem:[#allocation7 + $0x30] sm:$0xff]
    %v186 = vld [vmem:[#allocation7 + $0x38] sm:$0xff]
    %v187 = vld [vmem:[#allocation7 + $0x40] sm:$0xff]
    %v188 = vld [vmem:[#allocation7 + $0x48] sm:$0xff]
    %v189 = vld [vmem:[#allocation7 + $0x50] sm:$0xff]
    %v190 = vld [vmem:[#allocation7 + $0x58] sm:$0xff]
    %v191 = vld [vmem:[#allocation7 + $0x60] sm:$0xff]
    %v192 = vld [vmem:[#allocation7 + $0x68] sm:$0xff]
    %v193 = vld [vmem:[#allocation7 + $0x70] sm:$0xff]
    %v194 = vld [vmem:[#allocation7 + $0x78] sm:$0xff]
    %v195 = vld [vmem:[#allocation7 + $0x80] sm:$0xff]
    %v196 = vld [vmem:[#allocation7 + $0x88] sm:$0xff]
    %v197 = vld [vmem:[#allocation7 + $0x90] sm:$0xff]
    %v198 = vld [vmem:[#allocation7 + $0x98] sm:$0xff]
    %v199 = vld [vmem:[#allocation7 + $0xa0] sm:$0xff]
    %v200 = vld [vmem:[#allocation7 + $0xa8] sm:$0xff]
    %v201 = vld [vmem:[#allocation7 + $0xb0] sm:$0xff]
    %v202 = vld [vmem:[#allocation7 + $0xb8] sm:$0xff]
    %v203 = vld [vmem:[#allocation7 + $0xc0] sm:$0xff]
    %v204 = vld [vmem:[#allocation7 + $0xc8] sm:$0xff]
    %v205 = vld [vmem:[#allocation7 + $0xd0] sm:$0xff]
    %v206 = vld [vmem:[#allocation7 + $0xd8] sm:$0xff]
    %v207 = vld [vmem:[#allocation7 + $0xe0] sm:$0xff]
    %v208 = vld [vmem:[#allocation7 + $0xe8] sm:$0xff]
    %v209 = vld [vmem:[#allocation7 + $0xf0] sm:$0xff]
    %v210 = vld [vmem:[#allocation7 + $0xf8] sm:$0xff]
    %v211 = vld [vmem:[#allocation3] sm:$0xf]
    %v214 = vunpack.c.l.s4 1983009808
    %v215 = vunpack.c.0.s8 %v214
    %v216 = vlaneseq
    %v217 = vshrl.u32 %v216, 7
    %v218 = vsub.s32 %v215, %v217
    %v219 = vrot.slane %v211, %v218
    %v220 = vcombine.high %v219, %v219
    %223 = vmatprep.subr.mxu0 %v210
    %224 = vmatpush1.msra.mxu0 %v209
    %225 = vmatprep.subr.mxu0 %v208
    %226 = vmatpush1.msra.mxu0 %v207
    %227 = vmatprep.subr.mxu0 %v206
    %228 = vmatpush1.msra.mxu0 %v205
    %229 = vmatprep.subr.mxu0 %v204
    %230 = vmatpush1.msra.mxu0 %v203
    %231 = vmatprep.subr.mxu0 %v202
    %232 = vmatpush1.msra.mxu0 %v201
    %233 = vmatprep.subr.mxu0 %v200
    %234 = vmatpush1.msra.mxu0 %v199
    %235 = vmatprep.subr.mxu0 %v198
    %236 = vmatpush1.msra.mxu0 %v197
    %237 = vmatprep.subr.mxu0 %v196
    %238 = vmatpush1.msra.mxu0 %v195
    %239 = vmatprep.subr.mxu0 %v194
    %240 = vmatpush1.msra.mxu0 %v193
    %241 = vmatprep.subr.mxu0 %v192
    %242 = vmatpush1.msra.mxu0 %v191
    %243 = vmatprep.subr.mxu0 %v190
    %244 = vmatpush1.msra.mxu0 %v189
    %245 = vmatprep.subr.mxu0 %v188
    %246 = vmatpush1.msra.mxu0 %v187
    %247 = vmatprep.subr.mxu0 %v186
    %248 = vmatpush1.msra.mxu0 %v185
    %249 = vmatprep.subr.mxu0 %v184
    %250 = vmatpush1.msra.mxu0 %v183
    %251 = vmatprep.subr.mxu0 %v182
    %252 = vmatpush1.msra.mxu0 %v181
    %253 = vmatprep.subr.mxu0 %v180
    %254 = vmatpush1.msra.mxu0 %v179
    %255 = vmatprep.subr.mxu0 0.0
    %256 = vmatpush2.msra.mxu0 0.0
    %257 = vmatprep.subr.mxu0 0.0
    %258 = vmatpush2.msra.mxu0 0.0
    %259 = vmatprep.subr.mxu0 0.0
    %260 = vmatpush2.msra.mxu0 0.0
    %261 = vmatprep.subr.mxu0 0.0
    %262 = vmatpush2.msra.mxu0 0.0
    %263 = vmatprep.subr.mxu0 0.0
    %264 = vmatpush2.msra.mxu0 0.0
    %265 = vmatprep.subr.mxu0 0.0
    %266 = vmatpush2.msra.mxu0 0.0
    %267 = vmatprep.subr.mxu0 0.0
    %268 = vmatpush2.msra.mxu0 0.0
    %269 = vmatprep.subr.mxu0 0.0
    %270 = vmatpush2.msra.mxu0 0.0
    %271 = vmatprep.subr.mxu0 0.0
    %272 = vmatpush2.msra.mxu0 0.0
    %273 = vmatprep.subr.mxu0 0.0
    %274 = vmatpush2.msra.mxu0 0.0
    %275 = vmatprep.subr.mxu0 0.0
    %276 = vmatpush2.msra.mxu0 0.0
    %277 = vmatprep.subr.mxu0 0.0
    %278 = vmatpush2.msra.mxu0 0.0
    %279 = vmatprep.subr.mxu0 0.0
    %280 = vmatpush2.msra.mxu0 0.0
    %281 = vmatprep.subr.mxu0 0.0
    %282 = vmatpush2.msra.mxu0 0.0
    %283 = vmatprep.subr.mxu0 0.0
    %284 = vmatpush2.msra.mxu0 0.0
    %285 = vmatprep.subr.mxu0 0.0
    %286 = vmatpush2.msra.mxu0 0.0
    %287 = vmatprep.mubr.f32.mxu0 0.0
    %288 = vmatmul.mubr.f32.gmra.mxu0 %v178
    %v289 = vpop.f32.mrf.mxu0
    %v290 = vadd.f32 %v219, %v289
    %v291 = vpop.f32.mrf.mxu0
    %v292 = vadd.f32 %v220, %v291
    %293 = vdwg.mxu0
    %v294 = vxor.u32 %v290, 2147483648
    %v295 = vmul.f32 %v294, 1.442695
    %v296 = vpow.pop %v295
    %v297 = vadd.f32 %v296, 1.0
    %v298 = vrcp.pop %v297
    %v299 = vmul.f32 1.0, %v298
    %v300 = vxor.u32 %v292, 2147483648
    %v301 = vmul.f32 %v300, 1.442695
    %v302 = vpow.pop %v301
    %v303 = vadd.f32 %v302, 1.0
    %v304 = vrcp.pop %v303
    %v305 = vmul.f32 1.0, %v304
    %v306 = vsub.f32 %v305, %v178
    %v307 = vmul.f32 %v299, %v306
    %v308 = vadd.f32 %v178, %v307
    %309 = vst [vmem:[#allocation10] sm:$0x3] %v308
    %310 = vst [vmem:[#allocation2] sm:$0x3] %v308
    // Predicated region
    $region38: #{tpu_custom_call.1} parent=1 // pred_check
      _
    $region39: #{tpu_custom_call.1} parent=1 // pred_check_branch
      %312 = sbr.rel (0) target = $region41
    $region40: #{tpu_custom_call.1} parent=1 // pred_region
      %s314 = ssub.s32 32, 32
      %315 = vsyncadd [#allocation6], %s314
      %s317 = sshll.u32 [#allocation10], 4
      %s318 = int_to_ptr.vmem [resolvable:$true] %s317
      %320 = dma.vmem_to_hbm [thread:$0]  %s318, 32, %s5, [#allocation6]
    $region41: #{tpu_custom_call.1} parent=1 // pred_fallthru
      _
    // Predicated region
    $region42: #{tpu_custom_call.1} parent=1 // pred_check
      _
    $region43: #{tpu_custom_call.1} parent=1 // pred_check_branch
      %322 = sbr.rel (0) target = $region45
    $region44: #{tpu_custom_call.1} parent=1 // pred_region
      %323 = dma.done [#allocation6], 32
    $region45: #{tpu_custom_call.1} parent=1 // pred_fallthru
      _
    %324 = vsyncpa [#allocation5], 1
    %325 = vsyncpa [#allocation8], 1
    %326 = vsyncpa [#allocation6], 1

</llo_original>
